<compile_context>
chip_gen: v7x
topology: tpu7x:2x2x1
jax: 0.10.0
libtpu: 0.0.40
codegen_flags: <defaults>
</compile_context>

<pallas_src>
import functools

import jax
import jax.numpy as jnp
from jax import lax
from jax.experimental import pallas as pl
from jax.experimental.pallas import tpu as pltpu


def positioning(x, params, *, strip=128):
    """Positioning (CA_Block -> SA_Block) forward, fused in one Pallas kernel."""
    B, C, H, W = x.shape
    HW = H * W
    Cq = C // 8
    assert Cq >= 1 and C % 8 == 0, "channel count must be a multiple of 8"
    assert strip % 128 == 0 and HW % strip == 0, "H*W must be a multiple of 128"

    n_strips = HW // strip
    # q/k projection rows are zero-padded to a full bf16 sublane tile so all scratch
    # slices are tile-aligned; zero rows contribute exactly nothing to q^T k.
    qpad = ((Cq + 15) // 16) * 16
    n_rows = 2 * qpad + C

    x_flat = x.reshape(B, C, HW).astype(jnp.float32)
    gammas = jnp.asarray([params["gamma_c"], params["gamma_s"]], dtype=jnp.float32)

    def pad_rows(w, b):
        wp = jnp.zeros((qpad, C), jnp.float32).at[:Cq].set(w)
        bp = jnp.zeros((qpad, 1), jnp.float32).at[:Cq].set(b)
        return wp, bp

    wq_p, bq_p = pad_rows(params["wq"], params["bq"])
    wk_p, bk_p = pad_rows(params["wk"], params["bk"])
    # One fused weight for the three 1x1 convs -> a single MXU matmul per batch.
    w_fused = jnp.concatenate([wq_p, wk_p, params["wv"]], axis=0).astype(jnp.bfloat16)
    b_fused = jnp.concatenate([bq_p, bk_p, params["bv"]], axis=0).astype(jnp.float32)

    def kernel(gammas_ref, x_ref, wf_ref, bf_ref, out_ref, cab_sc, qkv_sc):
        s = pl.program_id(1)
        gamma_c = gammas_ref[0]
        gamma_s = gammas_ref[1]

        # ---- once per batch item (strip 0): CA block + fused q/k/v projection ----
        @pl.when(s == 0)
        def _():
            x_f32 = x_ref[...]                                   # (C, HW) f32
            x_bf = x_f32.astype(jnp.bfloat16)
            # channel attention: energy[c1, c2] = sum_hw x[c1, hw] * x[c2, hw]
            energy_c = lax.dot_general(
                x_bf, x_bf, (((1,), (1,)), ((), ())),
                preferred_element_type=jnp.float32)              # (C, C)
            e_c = jnp.exp(energy_c - jnp.max(energy_c, axis=-1, keepdims=True))
            inv_c = pl.reciprocal(jnp.sum(e_c, axis=-1, keepdims=True), approx=True)
            attn_c = e_c * inv_c                                 # softmax(dim=-1)
            ca = lax.dot_general(
                attn_c.astype(jnp.bfloat16), x_bf, (((1,), (0,)), ((), ())),
                preferred_element_type=jnp.float32)              # (C, HW)
            cab = gamma_c * ca + x_f32                           # gamma*out + x
            cab_sc[...] = cab
            # fused 1x1 convs: [q_pad ; k_pad ; v] = W_fused @ cab + b_fused
            qkv = lax.dot_general(
                wf_ref[...], cab.astype(jnp.bfloat16), (((1,), (0,)), ((), ())),
                preferred_element_type=jnp.float32) + bf_ref[...]
            qkv_sc[...] = qkv                                    # (2*qpad + C, HW)

        # ---- per 128-wide spatial strip: spatial attention ----
        col0 = pl.multiple_of(s * strip, strip)
        q_s = qkv_sc[0:qpad, pl.ds(col0, strip)].astype(jnp.bfloat16)  # (qpad, strip)
        k = qkv_sc[qpad:2 * qpad, :].astype(jnp.bfloat16)              # (qpad, HW)
        v = qkv_sc[2 * qpad:, :].astype(jnp.bfloat16)                  # (C, HW)

        # energy[i, j] = sum_c q[c, col0 + i] * k[c, j]
        energy_s = lax.dot_general(
            q_s, k, (((0,), (0,)), ((), ())),
            preferred_element_type=jnp.float32)                  # (strip, HW)
        e_s = jnp.exp(energy_s - jnp.max(energy_s, axis=-1, keepdims=True))
        inv_s = pl.reciprocal(jnp.sum(e_s, axis=-1, keepdims=True), approx=True)
        attn_s = e_s * inv_s                                     # softmax(dim=-1)

        # sa[c, i] = sum_j v[c, j] * attn[i, j]
        sa = lax.dot_general(
            v, attn_s.astype(jnp.bfloat16), (((1,), (1,)), ((), ())),
            preferred_element_type=jnp.float32)                  # (C, strip)

        out_ref[...] = gamma_s * sa + cab_sc[:, pl.ds(col0, strip)]

    out = pl.pallas_call(
        kernel,
        out_shape=jax.ShapeDtypeStruct((B, C, HW), jnp.float32),
        grid_spec=pltpu.PrefetchScalarGridSpec(
            num_scalar_prefetch=0,
            grid=(B, n_strips),
            in_specs=[
                pl.BlockSpec(memory_space=pltpu.MemorySpace.SMEM),             # gammas (2,)
                pl.BlockSpec((pl.Squeezed(), C, HW), lambda b, s: (b, 0, 0)),  # x (per batch)
                pl.BlockSpec((n_rows, C), lambda b, s: (0, 0)),                # fused W (bf16)
                pl.BlockSpec((n_rows, 1), lambda b, s: (0, 0)),                # fused bias (f32)
            ],
            out_specs=pl.BlockSpec((pl.Squeezed(), C, strip), lambda b, s: (b, 0, s)),
            scratch_shapes=[
                pltpu.VMEM((C, HW), jnp.float32),        # cab, persists across strips
                pltpu.VMEM((n_rows, HW), jnp.float32),   # [q_pad ; k_pad ; v]
            ],
        ),
        compiler_params=pltpu.CompilerParams(
            dimension_semantics=("parallel", "arbitrary")),
    )(gammas, x_flat, w_fused, b_fused)
    return out.reshape(B, C, H, W)


def positioning_ref(x, params, matmul_dtype=jnp.float32):
    """Pure-JAX reference mirroring the PyTorch forward.

    matmul_dtype=jnp.bfloat16 mirrors the kernel's bf16-operand / f32-accumulate
    matmul strategy; jnp.float32 gives the full-precision baseline.
    """
    B, C, H, W = x.shape
    HW = H * W
    xf = x.reshape(B, C, HW).astype(jnp.float32)
    c = lambda t: t.astype(matmul_dtype)
    mm = functools.partial(jnp.einsum, precision=lax.Precision.HIGHEST,
                           preferred_element_type=jnp.float32)
    # CA_Block
    energy = mm('bch,bdh->bcd', c(xf), c(xf))
    attn = jax.nn.softmax(energy, axis=-1)
    ca = mm('bcd,bdh->bch', c(attn), c(xf))
    cab = params["gamma_c"] * ca + xf
    # SA_Block
    q = mm('qc,bch->bqh', c(params["wq"]), c(cab)) + params["bq"][None]
    k = mm('qc,bch->bqh', c(params["wk"]), c(cab)) + params["bk"][None]
    v = mm('vc,bch->bvh', c(params["wv"]), c(cab)) + params["bv"][None]
    es = mm('bqi,bqj->bij', c(q), c(k))
    attn_s = jax.nn.softmax(es, axis=-1)
    sa = mm('bcj,bij->bci', c(v), c(attn_s))
    out = params["gamma_s"] * sa + cab
    return out.reshape(B, C, H, W)


if __name__ == "__main__":
    key = jax.random.PRNGKey(0)
    # channel=32 so the query/key 1x1 convs have C // 8 = 4 output channels.
    B, C, H, W = 2, 32, 16, 16
    Cq = C // 8

    kx, kq, kk, kv, kbq, kbk, kbv = jax.random.split(key, 7)
    x = jax.random.normal(kx, (B, C, H, W), jnp.float32)

    # Deterministic synthetic parameters (Conv2d 1x1 weights as (out, in) matrices).
    params = dict(
        gamma_c=1.0,   # nn.Parameter(torch.ones(1)) in CA_Block
        gamma_s=1.0,   # nn.Parameter(torch.ones(1)) in SA_Block
        wq=0.1 * jax.random.normal(kq, (Cq, C), jnp.float32),
        bq=0.01 * jax.random.normal(kbq, (Cq, 1), jnp.float32),
        wk=0.1 * jax.random.normal(kk, (Cq, C), jnp.float32),
        bk=0.01 * jax.random.normal(kbk, (Cq, 1), jnp.float32),
        wv=0.1 * jax.random.normal(kv, (C, C), jnp.float32),
        bv=0.01 * jax.random.normal(kbv, (C, 1), jnp.float32),
    )

    out = jax.block_until_ready(positioning(x, params))
    assert out.shape == (B, C, H, W)

    # Tight check vs. a reference that mirrors the kernel's bf16-operand matmuls.
    ref_bf16 = positioning_ref(x, params, matmul_dtype=jnp.bfloat16)
    assert jnp.allclose(out, ref_bf16, rtol=1e-2, atol=1e-2), \
        "mismatch vs bf16-matmul reference"
    # Looser sanity check vs. the exact f32 reference (bf16 MXU operands + approx
    # EUP softmax reciprocals introduce small, expected deviations).
    ref_f32 = positioning_ref(x, params, matmul_dtype=jnp.float32)
    assert jnp.allclose(out, ref_f32, rtol=5e-2, atol=5e-2), \
        "mismatch vs f32 reference"

    print("KERNEL_OK")
</pallas_src>

<mosaic_0001>
module attributes {stable_mosaic.version = 11 : i64} {
  func.func @kernel(%arg0: i32, %arg1: i32, %arg2: memref<2xf32, #tpu.memory_space<smem>>, %arg3: memref<1x32x256xf32, #tpu.memory_space<vmem>>, %arg4: memref<64x32xbf16, #tpu.memory_space<vmem>>, %arg5: memref<64x1xf32, #tpu.memory_space<vmem>>, %arg6: memref<1x32x128xf32, #tpu.memory_space<vmem>>, %arg7: memref<32x256xf32, #tpu.memory_space<vmem>>, %arg8: memref<64x256xf32, #tpu.memory_space<vmem>>) attributes {dimension_semantics = [#tpu.dimension_semantics<parallel>, #tpu.dimension_semantics<arbitrary>], iteration_bounds = array<i64: 2, 2>, scalar_prefetch = 0 : i64, scratch_operands = 2 : i64, tpu.core_type = #tpu.core_type<tc>, window_params = [{transform_indices = @transform_0, window_bounds = array<i64: 2>}, {transform_indices = @transform_1, window_bounds = array<i64: 1, 32, 256>}, {pipeline_mode = #tpu.pipeline_mode<synchronous>, transform_indices = @transform_2, window_bounds = array<i64: 64, 32>}, {pipeline_mode = #tpu.pipeline_mode<synchronous>, transform_indices = @transform_3, window_bounds = array<i64: 64, 1>}, {transform_indices = @transform_4, window_bounds = array<i64: 1, 32, 128>}]} {
    %c0 = arith.constant 0 : index
    %0 = memref.load %arg2[%c0] : memref<2xf32, #tpu.memory_space<smem>>
    %c1 = arith.constant 1 : index
    %1 = memref.load %arg2[%c1] : memref<2xf32, #tpu.memory_space<smem>>
    %c0_i32 = arith.constant 0 : i32
    %2 = arith.cmpi eq, %arg1, %c0_i32 : i32
    %3 = arith.extui %2 : i1 to i32
    %c0_i32_0 = arith.constant 0 : i32
    %4 = arith.cmpi ne, %3, %c0_i32_0 : i32
    scf.if %4 {
      %c0_11 = arith.constant 0 : index
      %c0_12 = arith.constant 0 : index
      %c0_13 = arith.constant 0 : index
      %35 = vector.load %arg3[%c0_11, %c0_12, %c0_13] : memref<1x32x256xf32, #tpu.memory_space<vmem>>, vector<1x32x256xf32>
      %36 = vector.shape_cast %35 : vector<1x32x256xf32> to vector<32x256xf32>
      %37 = arith.truncf %36 : vector<32x256xf32> to vector<32x256xbf16>
      %cst_14 = arith.constant dense<0.000000e+00> : vector<32x32xf32>
      %38 = tpu.matmul %37, %37, %cst_14 {dimension_numbers = #tpu.dot_dimension_numbers<[1], [1], [0], [0], [0, 0, 1, 0], [], []>} : vector<32x256xbf16>, vector<32x256xbf16>, vector<32x32xf32> -> vector<32x32xf32>
      %cst_15 = arith.constant dense<0xFF800000> : vector<32xf32>
      %39 = vector.multi_reduction <maximumf>, %38, %cst_15 [1] : vector<32x32xf32> to vector<32xf32>
      %40 = vector.shape_cast %39 : vector<32xf32> to vector<32x1xf32>
      %41 = vector.broadcast %40 : vector<32x1xf32> to vector<32x32xf32>
      %42 = arith.subf %38, %41 : vector<32x32xf32>
      %43 = math.exp %42 : vector<32x32xf32>
      %cst_16 = arith.constant dense<0.000000e+00> : vector<32xf32>
      %44 = vector.multi_reduction <add>, %43, %cst_16 [1] : vector<32x32xf32> to vector<32xf32>
      %45 = vector.shape_cast %44 : vector<32xf32> to vector<32x1xf32>
      %46 = tpu.reciprocal %45 {approx = true} : vector<32x1xf32> -> vector<32x1xf32>
      %47 = vector.broadcast %46 : vector<32x1xf32> to vector<32x32xf32>
      %48 = arith.mulf %43, %47 : vector<32x32xf32>
      %49 = arith.truncf %48 : vector<32x32xf32> to vector<32x32xbf16>
      %cst_17 = arith.constant dense<0.000000e+00> : vector<32x256xf32>
      %50 = tpu.matmul %49, %37, %cst_17 {dimension_numbers = #tpu.dot_dimension_numbers<[1], [0], [0], [1], [0, 0, 1, 1], [], []>} : vector<32x32xbf16>, vector<32x256xbf16>, vector<32x256xf32> -> vector<32x256xf32>
      %51 = vector.broadcast %0 : f32 to vector<32x256xf32>
      %52 = arith.mulf %51, %50 : vector<32x256xf32>
      %53 = arith.addf %52, %36 : vector<32x256xf32>
      %c0_18 = arith.constant 0 : index
      %c0_19 = arith.constant 0 : index
      %54 = vector.load %arg7[%c0_18, %c0_19] : memref<32x256xf32, #tpu.memory_space<vmem>>, vector<32x256xf32>
      tpu.vector_store %arg7[%c0_18, %c0_19], %53 {strides = array<i32>} : memref<32x256xf32, #tpu.memory_space<vmem>>, vector<32x256xf32>,
      %c0_20 = arith.constant 0 : index
      %c0_21 = arith.constant 0 : index
      %55 = vector.load %arg4[%c0_20, %c0_21] : memref<64x32xbf16, #tpu.memory_space<vmem>>, vector<64x32xbf16>
      %56 = arith.truncf %53 : vector<32x256xf32> to vector<32x256xbf16>
      %cst_22 = arith.constant dense<0.000000e+00> : vector<64x256xf32>
      %57 = tpu.matmul %55, %56, %cst_22 {dimension_numbers = #tpu.dot_dimension_numbers<[1], [0], [0], [1], [0, 0, 1, 1], [], []>} : vector<64x32xbf16>, vector<32x256xbf16>, vector<64x256xf32> -> vector<64x256xf32>
      %c0_23 = arith.constant 0 : index
      %c0_24 = arith.constant 0 : index
      %58 = vector.load %arg5[%c0_23, %c0_24] : memref<64x1xf32, #tpu.memory_space<vmem>>, vector<64x1xf32>
      %59 = vector.broadcast %58 : vector<64x1xf32> to vector<64x256xf32>
      %60 = arith.addf %57, %59 : vector<64x256xf32>
      %c0_25 = arith.constant 0 : index
      %c0_26 = arith.constant 0 : index
      %61 = vector.load %arg8[%c0_25, %c0_26] : memref<64x256xf32, #tpu.memory_space<vmem>>, vector<64x256xf32>
      tpu.vector_store %arg8[%c0_25, %c0_26], %60 {strides = array<i32>} : memref<64x256xf32, #tpu.memory_space<vmem>>, vector<64x256xf32>,
    } else {
    }
    %c128_i32 = arith.constant 128 : i32
    %5 = arith.muli %arg1, %c128_i32 : i32
    %6 = tpu.assume_multiple %5, 128 : i32
    %c0_1 = arith.constant 0 : index
    %7 = arith.index_cast %6 : i32 to index
    %8 = vector.load %arg8[%c0_1, %7] : memref<64x256xf32, #tpu.memory_space<vmem>>, vector<16x128xf32>
    %9 = arith.truncf %8 : vector<16x128xf32> to vector<16x128xbf16>
    %c16 = arith.constant 16 : index
    %c0_2 = arith.constant 0 : index
    %10 = vector.load %arg8[%c16, %c0_2] : memref<64x256xf32, #tpu.memory_space<vmem>>, vector<16x256xf32>
    %11 = arith.truncf %10 : vector<16x256xf32> to vector<16x256xbf16>
    %c32 = arith.constant 32 : index
    %c0_3 = arith.constant 0 : index
    %12 = vector.load %arg8[%c32, %c0_3] : memref<64x256xf32, #tpu.memory_space<vmem>>, vector<32x256xf32>
    %13 = arith.truncf %12 : vector<32x256xf32> to vector<32x256xbf16>
    %cst = arith.constant dense<0.000000e+00> : vector<128x256xf32>
    %14 = tpu.matmul %9, %11, %cst {dimension_numbers = #tpu.dot_dimension_numbers<[0], [0], [1], [1], [0, 1, 1, 1], [], []>} : vector<16x128xbf16>, vector<16x256xbf16>, vector<128x256xf32> -> vector<128x256xf32>
    %cst_4 = arith.constant dense<0xFF800000> : vector<128xf32>
    %15 = vector.multi_reduction <maximumf>, %14, %cst_4 [1] : vector<128x256xf32> to vector<128xf32>
    %16 = vector.shape_cast %15 : vector<128xf32> to vector<128x1xf32>
    %17 = vector.broadcast %16 : vector<128x1xf32> to vector<128x256xf32>
    %18 = arith.subf %14, %17 : vector<128x256xf32>
    %19 = math.exp %18 : vector<128x256xf32>
    %cst_5 = arith.constant dense<0.000000e+00> : vector<128xf32>
    %20 = vector.multi_reduction <add>, %19, %cst_5 [1] : vector<128x256xf32> to vector<128xf32>
    %21 = vector.shape_cast %20 : vector<128xf32> to vector<128x1xf32>
    %22 = tpu.reciprocal %21 {approx = true} : vector<128x1xf32> -> vector<128x1xf32>
    %23 = vector.broadcast %22 : vector<128x1xf32> to vector<128x256xf32>
    %24 = arith.mulf %19, %23 : vector<128x256xf32>
    %25 = arith.truncf %24 : vector<128x256xf32> to vector<128x256xbf16>
    %cst_6 = arith.constant dense<0.000000e+00> : vector<32x128xf32>
    %26 = tpu.matmul %13, %25, %cst_6 {dimension_numbers = #tpu.dot_dimension_numbers<[1], [1], [0], [0], [0, 0, 1, 0], [], []>} : vector<32x256xbf16>, vector<128x256xbf16>, vector<32x128xf32> -> vector<32x128xf32>
    %27 = vector.broadcast %1 : f32 to vector<32x128xf32>
    %28 = arith.mulf %27, %26 : vector<32x128xf32>
    %c0_7 = arith.constant 0 : index
    %29 = arith.index_cast %6 : i32 to index
    %30 = vector.load %arg7[%c0_7, %29] : memref<32x256xf32, #tpu.memory_space<vmem>>, vector<32x128xf32>
    %31 = arith.addf %28, %30 : vector<32x128xf32>
    %c0_8 = arith.constant 0 : index
    %c0_9 = arith.constant 0 : index
    %c0_10 = arith.constant 0 : index
    %32 = vector.load %arg6[%c0_8, %c0_9, %c0_10] : memref<1x32x128xf32, #tpu.memory_space<vmem>>, vector<1x32x128xf32>
    %33 = vector.shape_cast %32 : vector<1x32x128xf32> to vector<32x128xf32>
    %34 = vector.shape_cast %31 : vector<32x128xf32> to vector<1x32x128xf32>
    tpu.vector_store %arg6[%c0_8, %c0_9, %c0_10], %34 {strides = array<i32>} : memref<1x32x128xf32, #tpu.memory_space<vmem>>, vector<1x32x128xf32>,
    return
  }
  func.func @transform_0(%arg0: i32, %arg1: i32) -> i32 {
    %c0_i32 = arith.constant 0 : i32
    %c0_i32_0 = arith.constant 0 : i32
    return %c0_i32 : i32
  }
  func.func @transform_1(%arg0: i32, %arg1: i32) -> (i32, i32, i32) {
    %c0_i32 = arith.constant 0 : i32
    %c0_i32_0 = arith.constant 0 : i32
    %c0_i32_1 = arith.constant 0 : i32
    return %arg0, %c0_i32, %c0_i32_0 : i32, i32, i32
  }
  func.func @transform_2(%arg0: i32, %arg1: i32) -> (i32, i32) {
    %c0_i32 = arith.constant 0 : i32
    %c0_i32_0 = arith.constant 0 : i32
    %c0_i32_1 = arith.constant 0 : i32
    return %c0_i32, %c0_i32_0 : i32, i32
  }
  func.func @transform_3(%arg0: i32, %arg1: i32) -> (i32, i32) {
    %c0_i32 = arith.constant 0 : i32
    %c0_i32_0 = arith.constant 0 : i32
    %c0_i32_1 = arith.constant 0 : i32
    return %c0_i32, %c0_i32_0 : i32, i32
  }
  func.func @transform_4(%arg0: i32, %arg1: i32) -> (i32, i32, i32) {
    %c0_i32 = arith.constant 0 : i32
    %c0_i32_0 = arith.constant 0 : i32
    return %arg0, %c0_i32, %arg1 : i32, i32, i32
  }
}

</mosaic_0001>

<llo_original>
// kernel: tpu_custom_call.1
$region0: #{tpu_custom_call.1}
  #allocation0 [shape = 'u32[]', space=smem, size = 0x4, offset = 0x4, fixed_abs, tag = 'smem constant byte address 0x4 - core index']
  #allocation1 [shape = 'u32[144,128]{1,0:T(1,128)}', space=vmem, size = 0x12000, scoped, tag = 'internal scratch']
  #allocation2 [shape = 'f32[32,256]{1,0:T(8,128)}', space=vmem, size = 0x8000, scoped, tag = 'scratch operand']
  #allocation3 [shape = 'f32[64,256]{1,0:T(8,128)}', space=vmem, size = 0x10000, scoped, tag = 'scratch operand']
  %s0 = inlined_call_operand.vmem [shape: f32[2], index: 0, kind: input, shape index: {}]
  %s1 = inlined_call_operand.hbm [shape: f32[2,32,256], index: 1, kind: input, shape index: {}]
  %s2 = inlined_call_operand.vmem [shape: bf16[64,32], index: 2, kind: input, shape index: {}]
  %s3 = inlined_call_operand.vmem [shape: f32[64,1], index: 3, kind: input, shape index: {}]
  %s4 = inlined_call_operand.hbm [shape: f32[2,32,256], index: 4, kind: output, shape index: {}]
  %s5 = sld [smem:[#allocation0]]
  $region61: #{tpu_custom_call.1} parent=0
    _
  %s7 = ssub.s32 1, %s5
  %s8 = scalar_select 0, %s7, %s5
  $region1: #{tpu_custom_call.1} parent=0
    #allocation4 [shape = 'u8[512]{0}', space=smem, size = 0x200, scoped, tag = 'input window, operand 0, single buffered']
    #allocation5 [shape = 's32[2]{0}', space=sflag, size = 0x8, scoped, tag = 'scoped memory for tpu_custom_call.1']
    #allocation6 [shape = 's32[2]{0}', space=sflag, size = 0x8, scoped, tag = 'scoped memory for tpu_custom_call.1']
    #allocation7 [shape = 's32[2]{0}', space=sflag, size = 0x8, scoped, tag = 'scoped memory for tpu_custom_call.1']
    #allocation8 [shape = 'u8[65536]{0}', space=vmem, size = 0x10000, scoped, tag = 'input window, operand 1']
    #allocation9 [shape = 'u8[32768]{0}', space=vmem, size = 0x8000, scoped, tag = 'output window, operand 0']
    %9 = vsyncpa [#allocation7], 0
    %10 = vsyncpa [#allocation5], 0
    %s11 = scalar_lea.sflag [#allocation5], 1
    %12 = vsyncpa %s11, 0
    %13 = vsyncpa [#allocation6], 0
    %s14 = scalar_lea.sflag [#allocation6], 1
    %15 = vsyncpa %s14, 0
    loop: start=0, step=1, limit=6
    $region2: #{tpu_custom_call.1} parent=1 // loop_pre_header
      _
    $region3: #{tpu_custom_call.1} parent=1 // loop_header
      %s17 = sphi 0, %s21
      %p18 = scmp.ge.s32.totalorder %s17, 6
      %s24 = sphi 0, %s36
      %s25 = sphi 0, %s32
      %s26 = sphi 0, %s24
      %s27 = sphi 0, %s25
      %s28 = sphi 0, %s26
      %s29 = sphi 0, %s27
      %s37 = sphi 0, %s37
      %s39 = sphi 0, %s37
      %s40 = sphi 0, %s39
      %s54 = sphi 0, %s40
      %s60 = sphi 0, %s62
      %s63 = sphi 0, %s60
      %s64 = sphi 0, %s63
      %s80 = sphi 0, %s64
      %s84 = sphi 0, %s84
      %s86 = sphi 0, %s84
      %s87 = sphi 0, %s86
      %s101 = sphi 0, %s87
      %s105 = sphi 0, %s105
      %s107 = sphi 0, %s105
      %s108 = sphi 0, %s107
      %s122 = sphi 0, %s108
      %s130 = sphi 0, %s132
      %s133 = sphi 0, %s130
      %s134 = sphi 0, %s133
      %s150 = sphi 0, %s134
    $region4: #{tpu_custom_call.1} parent=1 // loop_header_branch
      %20 = sbr.rel (%p18) target = $region8
    $region5: #{tpu_custom_call.1} parent=1 // loop_body
      %s22 = ssub.s32 %s17, 1
      %s23 = ssub.s32 %s17, 2
      %s30 = sadd.s32 1, %s25
      %p31 = scmp.ge.s32.totalorder %s30, 2
      %s32 = scalar_select %p31, 0, %s30
      %s33 = sadd.s32 1, %s24
      %s34 = scalar_select %p31, %s33, %s24
      %p35 = scmp.ge.s32.totalorder %s34, 2
      %s36 = scalar_select %p35, 0, %s34
      %s38 = sadd.s32 %s37, 1
      %p41 = scmp.eq.s32.totalorder %s17, 3
      %p42 = scmp.ne.s32.totalorder %s37, %s39
      %p43 = scmp.eq.s32.totalorder %s17, 0
      %p44 = por %p42, %p43
      %p45 = scmp.ne.s32.totalorder %s37, %s39
      %p46 = scmp.eq.s32.totalorder %s22, 3
      %p47 = por %p45, %p46
      %p48 = scmp.ne.s32.totalorder %s39, %s40
      %p49 = scmp.eq.s32.totalorder %s22, 0
      %p50 = por %p48, %p49
      %p51 = scmp.ne.s32.totalorder %s39, %s40
      %p52 = scmp.eq.s32.totalorder %s23, 3
      %p53 = por %p51, %p52
      %p55 = scmp.ne.s32.totalorder %s40, %s54
      %p56 = scmp.eq.s32.totalorder %s23, 0
      %p57 = por %p55, %p56
      %s58 = ssub.s32 %s24, %s36
      %p59 = scmp.eq.s32.totalorder %s58, 0
      %s61 = sadd.s32 %s60, 1
      %s62 = scalar_select %p59, %s60, %s61
      %p65 = pneg %p59
      %p66 = scmp.eq.s32.totalorder %s17, 3
      %p67 = por %p65, %p66
      %p68 = scmp.ne.s32.totalorder %s60, %s63
      %p69 = scmp.eq.s32.totalorder %s17, 0
      %p70 = por %p68, %p69
      %p71 = scmp.ne.s32.totalorder %s60, %s63
      %p72 = scmp.eq.s32.totalorder %s22, 3
      %p73 = por %p71, %p72
      %p74 = scmp.ne.s32.totalorder %s63, %s64
      %p75 = scmp.eq.s32.totalorder %s22, 0
      %p76 = por %p74, %p75
      %p77 = scmp.ne.s32.totalorder %s63, %s64
      %p78 = scmp.eq.s32.totalorder %s23, 3
      %p79 = por %p77, %p78
      %p81 = scmp.ne.s32.totalorder %s64, %s80
      %p82 = scmp.eq.s32.totalorder %s23, 0
      %p83 = por %p81, %p82
      %s85 = sadd.s32 %s84, 1
      %p88 = scmp.eq.s32.totalorder %s17, 3
      %p89 = scmp.ne.s32.totalorder %s84, %s86
      %p90 = scmp.eq.s32.totalorder %s17, 0
      %p91 = por %p89, %p90
      %p92 = scmp.ne.s32.totalorder %s84, %s86
      %p93 = scmp.eq.s32.totalorder %s22, 3
      %p94 = por %p92, %p93
      %p95 = scmp.ne.s32.totalorder %s86, %s87
      %p96 = scmp.eq.s32.totalorder %s22, 0
      %p97 = por %p95, %p96
      %p98 = scmp.ne.s32.totalorder %s86, %s87
      %p99 = scmp.eq.s32.totalorder %s23, 3
      %p100 = por %p98, %p99
      %p102 = scmp.ne.s32.totalorder %s87, %s101
      %p103 = scmp.eq.s32.totalorder %s23, 0
      %p104 = por %p102, %p103
      %s106 = sadd.s32 %s105, 1
      %p109 = scmp.eq.s32.totalorder %s17, 3
      %p110 = scmp.ne.s32.totalorder %s105, %s107
      %p111 = scmp.eq.s32.totalorder %s17, 0
      %p112 = por %p110, %p111
      %p113 = scmp.ne.s32.totalorder %s105, %s107
      %p114 = scmp.eq.s32.totalorder %s22, 3
      %p115 = por %p113, %p114
      %p116 = scmp.ne.s32.totalorder %s107, %s108
      %p117 = scmp.eq.s32.totalorder %s22, 0
      %p118 = por %p116, %p117
      %p119 = scmp.ne.s32.totalorder %s107, %s108
      %p120 = scmp.eq.s32.totalorder %s23, 3
      %p121 = por %p119, %p120
      %p123 = scmp.ne.s32.totalorder %s108, %s122
      %p124 = scmp.eq.s32.totalorder %s23, 0
      %p125 = por %p123, %p124
      %s126 = ssub.s32 %s24, %s36
      %s127 = ssub.s32 %s25, %s32
      %s128 = sor.u32 %s126, %s127
      %p129 = scmp.eq.s32.totalorder %s128, 0
      %s131 = sadd.s32 %s130, 1
      %s132 = scalar_select %p129, %s130, %s131
      %p135 = pneg %p129
      %p136 = scmp.eq.s32.totalorder %s17, 3
      %p137 = por %p135, %p136
      %p138 = scmp.ne.s32.totalorder %s130, %s133
      %p139 = scmp.eq.s32.totalorder %s17, 0
      %p140 = por %p138, %p139
      %p141 = scmp.ne.s32.totalorder %s130, %s133
      %p142 = scmp.eq.s32.totalorder %s22, 3
      %p143 = por %p141, %p142
      %p144 = scmp.ne.s32.totalorder %s133, %s134
      %p145 = scmp.eq.s32.totalorder %s22, 0
      %p146 = por %p144, %p145
      %p147 = scmp.ne.s32.totalorder %s133, %s134
      %p148 = scmp.eq.s32.totalorder %s23, 3
      %p149 = por %p147, %p148
      %p151 = scmp.ne.s32.totalorder %s134, %s150
      %p152 = scmp.eq.s32.totalorder %s23, 0
      %p153 = por %p151, %p152
      %p154 = scmp.le.s32.totalorder 1, %s17
      %p155 = scmp.lt.s32.totalorder %s17, 5
      %p156 = pnand %p154, %p155
      %p157 = pneg %p156
      // Predicated region
      $region9: #{tpu_custom_call.1} parent=5 // pred_check
        _
      $region10: #{tpu_custom_call.1} parent=5 // pred_check_branch
        %159 = sbr.rel (%p156) target = $region12
      $region11: #{tpu_custom_call.1} parent=5 // pred_region
        %s160 = ssub.s32 %s17, 1
        // Predicated region
        $region13: #{tpu_custom_call.1} parent=11 // pred_check
          %p161 = pneg %p50
        $region14: #{tpu_custom_call.1} parent=11 // pred_check_branch
          %163 = sbr.rel (%p161) target = $region16
        $region15: #{tpu_custom_call.1} parent=11 // pred_region
          %s165 = ssub.s32 16, 16
          %166 = vsyncadd [#allocation7], %s165
          %s168 = sshll.u32 %s0, 4
          %s169 = int_to_ptr.vmem [resolvable:$true] %s168
          %171 = dma.vmem_to_smem %s169, 16, [#allocation4], [#allocation7]
        $region16: #{tpu_custom_call.1} parent=11 // pred_fallthru
          _
        // Predicated region
        $region17: #{tpu_custom_call.1} parent=11 // pred_check
          %p172 = pneg %p97
        $region18: #{tpu_custom_call.1} parent=11 // pred_check_branch
          %174 = sbr.rel (%p172) target = $region20
        $region19: #{tpu_custom_call.1} parent=11 // pred_region
          _
        $region20: #{tpu_custom_call.1} parent=11 // pred_fallthru
          _
        // Predicated region
        $region21: #{tpu_custom_call.1} parent=11 // pred_check
          %p175 = pneg %p118
        $region22: #{tpu_custom_call.1} parent=11 // pred_check_branch
          %177 = sbr.rel (%p175) target = $region24
        $region23: #{tpu_custom_call.1} parent=11 // pred_region
          _
        $region24: #{tpu_custom_call.1} parent=11 // pred_fallthru
          _
      $region12: #{tpu_custom_call.1} parent=5 // pred_fallthru
        _
      %p178 = scmp.lt.s32.totalorder %s17, 4
      // Predicated region
      $region25: #{tpu_custom_call.1} parent=5 // pred_check
        %p179 = pneg %p178
      $region26: #{tpu_custom_call.1} parent=5 // pred_check_branch
        %181 = sbr.rel (%p179) target = $region28
      $region27: #{tpu_custom_call.1} parent=5 // pred_region
        // Predicated region
        $region29: #{tpu_custom_call.1} parent=27 // pred_check
          %p182 = pneg %p70
        $region30: #{tpu_custom_call.1} parent=27 // pred_check_branch
          %184 = sbr.rel (%p182) target = $region32
        $region31: #{tpu_custom_call.1} parent=27 // pred_region
          %s185 = sand.u32 %s60, 1
          %s186 = scalar_lea.sflag [#allocation5], %s185
          %s187 = sand.u32 %s60, 1
          %s188 = smul.addr %s187, 64
          %s189 = scalar_lea.vmem [#allocation8], %s188
          %s191 = ssub.s32 1024, 1024
          %192 = vsyncadd %s186, %s191
          %s193 = smul.addr %s24, 8
          %s194 = smul.addr %s193, 128
          %s195 = scalar_lea.hbm %s1, %s194
          %s196 = sshll.u32 %s189, 4
          %s197 = int_to_ptr.vmem [resolvable:$true] %s196
          %202 = dma.hbm_to_vmem [thread:$0]  %s195, 1024, %s197, %s186, 256, 256, 16
        $region32: #{tpu_custom_call.1} parent=27 // pred_fallthru
          _
      $region28: #{tpu_custom_call.1} parent=5 // pred_fallthru
        _
      %p203 = scmp.le.s32.totalorder 1, %s17
      %p204 = scmp.lt.s32.totalorder %s17, 5
      %p205 = pnand %p203, %p204
      %p206 = pneg %p205
      // Predicated region
      $region33: #{tpu_custom_call.1} parent=5 // pred_check
        _
      $region34: #{tpu_custom_call.1} parent=5 // pred_check_branch
        %208 = sbr.rel (%p205) target = $region36
      $region35: #{tpu_custom_call.1} parent=5 // pred_region
        %s209 = ssub.s32 %s17, 1
        // Predicated region
        $region37: #{tpu_custom_call.1} parent=35 // pred_check
          %p210 = pneg %p50
        $region38: #{tpu_custom_call.1} parent=35 // pred_check_branch
          %212 = sbr.rel (%p210) target = $region40
        $region39: #{tpu_custom_call.1} parent=35 // pred_region
          %213 = dma.done [#allocation7], 16
        $region40: #{tpu_custom_call.1} parent=35 // pred_fallthru
          _
        %s214 = sand.u32 %s63, 1
        %s215 = scalar_lea.sflag [#allocation5], %s214
        %s216 = sand.u32 %s63, 1
        %s217 = smul.addr %s216, 64
        %s218 = scalar_lea.vmem [#allocation8], %s217
        // Predicated region
        $region41: #{tpu_custom_call.1} parent=35 // pred_check
          %p219 = pneg %p76
        $region42: #{tpu_custom_call.1} parent=35 // pred_check_branch
          %221 = sbr.rel (%p219) target = $region44
        $region43: #{tpu_custom_call.1} parent=35 // pred_region
          %222 = dma.done %s215, 1024
        $region44: #{tpu_custom_call.1} parent=35 // pred_fallthru
          _
        %223 = sfence
        %p224 = pneg %p50
        %p225 = pneg %p47
        %s226 = sand.u32 %s63, 1
        %s227 = scalar_lea.sflag [#allocation5], %s226
        %s228 = sand.u32 %s63, 1
        %s229 = smul.addr %s228, 64
        %s230 = scalar_lea.vmem [#allocation8], %s229
        %p231 = pneg %p76
        %p232 = pneg %p73
        %p233 = pneg %p97
        %p234 = pneg %p94
        %p235 = pneg %p118
        %p236 = pneg %p115
        %p237 = pneg %p146
        %p238 = pneg %p143
        %s239 = sand.u32 %s133, 1
        %s240 = scalar_lea.sflag [#allocation6], %s239
        %s241 = sand.u32 %s133, 1
        %s242 = smul.addr %s241, 32
        %s243 = scalar_lea.vmem [#allocation9], %s242
        %s245 = sld [smem:[#allocation4]]
        %s246 = sld [smem:[#allocation4 + $0x1]]
        %p247 = scmp.eq.s32.totalorder %s27, 0
        // Predicated region
        $region45: #{tpu_custom_call.1} parent=35 // pred_check
          %p248 = pneg %p247
        $region46: #{tpu_custom_call.1} parent=35 // pred_check_branch
          %250 = sbr.rel (%p248) target = $region48
        $region47: #{tpu_custom_call.1} parent=35 // pred_region
          %v251 = vld [vmem:[%s218] sm:$0xff]
          %v252 = vld [vmem:[%s218 + $0x8] sm:$0xff]
          %v253 = vld [vmem:[%s218 + $0x10] sm:$0xff]
          %v254 = vld [vmem:[%s218 + $0x18] sm:$0xff]
          %v255 = vld [vmem:[%s218 + $0x20] sm:$0xff]
          %v256 = vld [vmem:[%s218 + $0x28] sm:$0xff]
          %v257 = vld [vmem:[%s218 + $0x30] sm:$0xff]
          %v258 = vld [vmem:[%s218 + $0x38] sm:$0xff]
          %v259 = vpack.c.bf16 %v253, %v251
          %v260 = vpack.c.bf16 %v254, %v252
          %v261 = vpack.c.bf16 %v257, %v255
          %v262 = vpack.c.bf16 %v258, %v256
          %263 = vmatprep.subr.bf16.mxu0 %v260
          %264 = vmatpush1.bf16.xpose.msra.mxu0 %v259
          %265 = vmatprep.subr.bf16.mxu0 %v262
          %266 = vmatpush1.bf16.xpose.msra.mxu0 %v261
          %267 = vmatprep.subr.bf16.mxu0 0
          %268 = vmatpush1.bf16.xpose.msra.mxu0 0
          %269 = vmatprep.subr.bf16.mxu0 0
          %270 = vmatpush1.bf16.xpose.msra.mxu0 0
          %271 = vmatprep.subr.bf16.mxu0 0
          %272 = vmatpush1.bf16.xpose.msra.mxu0 0
          %273 = vmatprep.subr.bf16.mxu0 0
          %274 = vmatpush1.bf16.xpose.msra.mxu0 0
          %275 = vmatprep.subr.bf16.mxu0 0
          %276 = vmatpush1.bf16.xpose.msra.mxu0 0
          %277 = vmatprep.subr.bf16.mxu0 0
          %278 = vmatpush1.bf16.xpose.msra.mxu0 0
          %279 = vmatprep.subr.bf16.mxu0 0
          %280 = vmatpush1.bf16.xpose.msra.mxu0 0
          %281 = vmatprep.subr.bf16.mxu0 0
          %282 = vmatpush1.bf16.xpose.msra.mxu0 0
          %283 = vmatprep.subr.bf16.mxu0 0
          %284 = vmatpush1.bf16.xpose.msra.mxu0 0
          %285 = vmatprep.subr.bf16.mxu0 0
          %286 = vmatpush1.bf16.xpose.msra.mxu0 0
          %287 = vmatprep.subr.bf16.mxu0 0
          %288 = vmatpush1.bf16.xpose.msra.mxu0 0
          %289 = vmatprep.subr.bf16.mxu0 0
          %290 = vmatpush1.bf16.xpose.msra.mxu0 0
          %291 = vmatprep.subr.bf16.mxu0 0
          %292 = vmatpush1.bf16.xpose.msra.mxu0 0
          %293 = vmatprep.subr.bf16.mxu0 0
          %294 = vmatpush1.bf16.xpose.msra.mxu0 0
          %295 = vmatprep.mubr.bf16.mxu0 %v260
          %296 = vmatmul.mubr.bf16.gmra.mrb[0].mxu0 %v259
          %v297 = vpop.f32.mrb[0].mxu0
          %v298 = vadd.f32 0.0, %v297
          %v299 = vpop.f32.mrb[0].mxu0
          %v300 = vpop.f32.mrb[0].mxu0
          %v301 = vadd.f32 0.0, %v300
          %v302 = vpop.f32.mrb[0].mxu0
          %303 = vmatprep.mubr.bf16.mxu0 %v262
          %304 = vmatmul.mubr.bf16.gmra.mrb[0].mxu0 %v261
          %v305 = vpop.f32.mrb[0].mxu0
          %v306 = vadd.f32 0.0, %v305
          %v307 = vpop.f32.mrb[0].mxu0
          %v308 = vpop.f32.mrb[0].mxu0
          %v309 = vadd.f32 0.0, %v308
          %v310 = vpop.f32.mrb[0].mxu0
          %311 = vdwg.mxu0
          %vm312 = vcmask 261120
          %v313 = vsel %vm312, %v298, -inf
          %314 = vmax.xlane.f32.xlu0 %v313
          %v315 = vpop.xlane.xlu0 %314
          %v316 = vsel %vm312, %v301, -inf
          %317 = vmax.xlane.f32.xlu0 %v316
          %v318 = vpop.xlane.xlu0 %317
          %v319 = vsel %vm312, %v306, -inf
          %320 = vmax.xlane.f32.xlu0 %v319
          %v321 = vpop.xlane.xlu0 %320
          %v322 = vsel %vm312, %v309, -inf
          %323 = vmax.xlane.f32.xlu0 %v322
          %v324 = vpop.xlane.xlu0 %323
          %v325 = vsub.f32 %v298, %v315
          %v326 = vsub.f32 %v301, %v318
          %v327 = vsub.f32 %v306, %v321
          %v328 = vsub.f32 %v309, %v324
          %v329 = vmul.f32 %v325, 1.442695
          %v330 = vpow.pop %v329
          %v331 = vmul.f32 %v326, 1.442695
          %v332 = vpow.pop %v331
          %v333 = vmul.f32 %v327, 1.442695
          %v334 = vpow.pop %v333
          %v335 = vmul.f32 %v328, 1.442695
          %v336 = vpow.pop %v335
          %v337 = vsel %vm312, %v330, 0.0
          %338 = vadd.xlane.f32.xlu0 %v337
          %v339 = vpop.xlane.xlu0 %338
          %v340 = vsel %vm312, %v332, 0.0
          %341 = vadd.xlane.f32.xlu0 %v340
          %v342 = vpop.xlane.xlu0 %341
          %v343 = vsel %vm312, %v334, 0.0
          %344 = vadd.xlane.f32.xlu0 %v343
          %v345 = vpop.xlane.xlu0 %344
          %v346 = vsel %vm312, %v336, 0.0
          %347 = vadd.xlane.f32.xlu0 %v346
          %v348 = vpop.xlane.xlu0 %347
          %v349 = vrcp.pop %v339
          %v350 = vrcp.pop %v342
          %v351 = vrcp.pop %v345
          %v352 = vrcp.pop %v348
          %v353 = vmul.f32 %v330, %v349
          %v354 = vmul.f32 %v332, %v350
          %v355 = vmul.f32 %v334, %v351
          %v356 = vmul.f32 %v336, %v352
          %v357 = vpack.c.bf16 %v354, %v353
          %v358 = vpack.c.bf16 %v356, %v355
          %v360 = vsel %vm312, %v357, 0
          %v363 = vsel %vm312, %v358, 0
          %365 = vmatprep.subr.bf16.mxu0 %v260
          %366 = vmatpush1.bf16.msra.mxu0 %v259
          %367 = vmatprep.subr.bf16.mxu0 %v262
          %368 = vmatpush1.bf16.msra.mxu0 %v261
          %369 = vmatprep.subr.bf16.mxu0 0
          %370 = vmatpush1.bf16.msra.mxu0 0
          %371 = vmatprep.subr.bf16.mxu0 0
          %372 = vmatpush1.bf16.msra.mxu0 0
          %373 = vmatprep.subr.bf16.mxu0 0
          %374 = vmatpush1.bf16.msra.mxu0 0
          %375 = vmatprep.subr.bf16.mxu0 0
          %376 = vmatpush1.bf16.msra.mxu0 0
          %377 = vmatprep.subr.bf16.mxu0 0
          %378 = vmatpush1.bf16.msra.mxu0 0
          %379 = vmatprep.subr.bf16.mxu0 0
          %380 = vmatpush1.bf16.msra.mxu0 0
          %381 = vmatprep.subr.bf16.mxu0 0
          %382 = vmatpush1.bf16.msra.mxu0 0
          %383 = vmatprep.subr.bf16.mxu0 0
          %384 = vmatpush1.bf16.msra.mxu0 0
          %385 = vmatprep.subr.bf16.mxu0 0
          %386 = vmatpush1.bf16.msra.mxu0 0
          %387 = vmatprep.subr.bf16.mxu0 0
          %388 = vmatpush1.bf16.msra.mxu0 0
          %389 = vmatprep.subr.bf16.mxu0 0
          %390 = vmatpush1.bf16.msra.mxu0 0
          %391 = vmatprep.subr.bf16.mxu0 0
          %392 = vmatpush1.bf16.msra.mxu0 0
          %393 = vmatprep.subr.bf16.mxu0 0
          %394 = vmatpush1.bf16.msra.mxu0 0
          %395 = vmatprep.subr.bf16.mxu0 0
          %396 = vmatpush1.bf16.msra.mxu0 0
          %397 = vmatprep.mubr.bf16.mxu0 0
          %398 = vmatmul.mubr.bf16.gmra.mrb[0].mxu0 %v360
          %v399 = vpop.f32.mrb[0].mxu0
          %v400 = vadd.f32 0.0, %v399
          %v401 = vpop.f32.mrb[0].mxu0
          %v402 = vadd.f32 0.0, %v401
          %v403 = vpop.f32.mrb[0].mxu0
          %v404 = vadd.f32 0.0, %v403
          %v405 = vpop.f32.mrb[0].mxu0
          %v406 = vadd.f32 0.0, %v405
          %407 = vmatprep.mubr.bf16.mxu0 0
          %408 = vmatmul.mubr.bf16.gmra.mrb[0].mxu0 %v363
          %v409 = vpop.f32.mrb[0].mxu0
          %v410 = vadd.f32 0.0, %v409
          %v411 = vpop.f32.mrb[0].mxu0
          %v412 = vadd.f32 0.0, %v411
          %v413 = vpop.f32.mrb[0].mxu0
          %v414 = vadd.f32 0.0, %v413
          %v415 = vpop.f32.mrb[0].mxu0
          %v416 = vadd.f32 0.0, %v415
          %417 = vdwg.mxu0
          %v418 = vstv %s245
          %v419 = vmul.f32 %v418, %v400
          %v420 = vmul.f32 %v418, %v402
          %v421 = vmul.f32 %v418, %v404
          %v422 = vmul.f32 %v418, %v406
          %v423 = vmul.f32 %v418, %v410
          %v424 = vmul.f32 %v418, %v412
          %v425 = vmul.f32 %v418, %v414
          %v426 = vmul.f32 %v418, %v416
          %v427 = vadd.f32 %v419, %v251
          %v428 = vadd.f32 %v420, %v252
          %v429 = vadd.f32 %v421, %v253
          %v430 = vadd.f32 %v422, %v254
          %v431 = vadd.f32 %v423, %v255
          %v432 = vadd.f32 %v424, %v256
          %v433 = vadd.f32 %v425, %v257
          %v434 = vadd.f32 %v426, %v258
          %435 = vst [vmem:[#allocation2] sm:$0xff] %v427
          %436 = vst [vmem:[#allocation2 + $0x8] sm:$0xff] %v428
          %437 = vst [vmem:[#allocation2 + $0x10] sm:$0xff] %v429
          %438 = vst [vmem:[#allocation2 + $0x18] sm:$0xff] %v430
          %439 = vst [vmem:[#allocation2 + $0x20] sm:$0xff] %v431
          %440 = vst [vmem:[#allocation2 + $0x28] sm:$0xff] %v432
          %441 = vst [vmem:[#allocation2 + $0x30] sm:$0xff] %v433
          %442 = vst [vmem:[#allocation2 + $0x38] sm:$0xff] %v434
          %v443 = vld [vmem:[%s2] sm:$0xf]
          %v444 = vld [vmem:[%s2 + $0x4] sm:$0xf]
          %v445 = vld [vmem:[%s2 + $0x8] sm:$0xf]
          %v446 = vld [vmem:[%s2 + $0xc] sm:$0xf]
          %v447 = vld [vmem:[%s2 + $0x10] sm:$0xf]
          %v448 = vld [vmem:[%s2 + $0x14] sm:$0xf]
          %v449 = vld [vmem:[%s2 + $0x18] sm:$0xf]
          %v450 = vld [vmem:[%s2 + $0x1c] sm:$0xf]
          %v451 = vpack.c.bf16 %v429, %v427
          %v452 = vpack.c.bf16 %v430, %v428
          %v453 = vpack.c.bf16 %v433, %v431
          %v454 = vpack.c.bf16 %v434, %v432
          %v455 = vld [vmem:[%s3] sm:$0xff]
          %v456 = vld [vmem:[%s3 + $0x8] sm:$0xff]
          %v457 = vld [vmem:[%s3 + $0x10] sm:$0xff]
          %v458 = vld [vmem:[%s3 + $0x18] sm:$0xff]
          %v459 = vld [vmem:[%s3 + $0x20] sm:$0xff]
          %v460 = vld [vmem:[%s3 + $0x28] sm:$0xff]
          %v461 = vld [vmem:[%s3 + $0x30] sm:$0xff]
          %v462 = vld [vmem:[%s3 + $0x38] sm:$0xff]
          %464 = vset.pattern.permute.xlu0 0
          %465 = vperm.xlu0 %464, %v455
          %v466 = vpop.permute.xlu0 %465
          %469 = vset.pattern.permute.xlu0 0
          %470 = vperm.xlu0 %469, %v456
          %v471 = vpop.permute.xlu0 %470
          %474 = vset.pattern.permute.xlu0 0
          %475 = vperm.xlu0 %474, %v457
          %v476 = vpop.permute.xlu0 %475
          %479 = vset.pattern.permute.xlu0 0
          %480 = vperm.xlu0 %479, %v458
          %v481 = vpop.permute.xlu0 %480
          %484 = vset.pattern.permute.xlu0 0
          %485 = vperm.xlu0 %484, %v459
          %v486 = vpop.permute.xlu0 %485
          %489 = vset.pattern.permute.xlu0 0
          %490 = vperm.xlu0 %489, %v460
          %v491 = vpop.permute.xlu0 %490
          %494 = vset.pattern.permute.xlu0 0
          %495 = vperm.xlu0 %494, %v461
          %v496 = vpop.permute.xlu0 %495
          %499 = vset.pattern.permute.xlu0 0
          %500 = vperm.xlu0 %499, %v462
          %v501 = vpop.permute.xlu0 %500
          %v511 = vunpack.c.l.b16 %v443
          %v512 = vunpack.c.l.b16 %v444
          %v513 = vunpack.c.l.b16 %v445
          %v514 = vunpack.c.l.b16 %v446
          %v515 = vunpack.c.l.b16 %v447
          %v516 = vunpack.c.l.b16 %v448
          %v517 = vunpack.c.l.b16 %v449
          %v518 = vunpack.c.l.b16 %v450
          %v519 = vpack.c.b16 %v512, %v511
          %v520 = vpack.c.b16 %v514, %v513
          %v521 = vpack.c.b16 %v516, %v515
          %v522 = vpack.c.b16 %v518, %v517
          %v524 = vsel %vm312, %v519, 0
          %v527 = vsel %vm312, %v520, 0
          %v530 = vsel %vm312, %v521, 0
          %v533 = vsel %vm312, %v522, 0
          %535 = vmatprep.subr.bf16.mxu0 %v452
          %536 = vmatpush1.bf16.msra.mxu0 %v451
          %537 = vmatprep.subr.bf16.mxu0 %v454
          %538 = vmatpush1.bf16.msra.mxu0 %v453
          %539 = vmatprep.subr.bf16.mxu0 0
          %540 = vmatpush1.bf16.msra.mxu0 0
          %541 = vmatprep.subr.bf16.mxu0 0
          %542 = vmatpush1.bf16.msra.mxu0 0
          %543 = vmatprep.subr.bf16.mxu0 0
          %544 = vmatpush1.bf16.msra.mxu0 0
          %545 = vmatprep.subr.bf16.mxu0 0
          %546 = vmatpush1.bf16.msra.mxu0 0
          %547 = vmatprep.subr.bf16.mxu0 0
          %548 = vmatpush1.bf16.msra.mxu0 0
          %549 = vmatprep.subr.bf16.mxu0 0
          %550 = vmatpush1.bf16.msra.mxu0 0
          %551 = vmatprep.subr.bf16.mxu0 0
          %552 = vmatpush1.bf16.msra.mxu0 0
          %553 = vmatprep.subr.bf16.mxu0 0
          %554 = vmatpush1.bf16.msra.mxu0 0
          %555 = vmatprep.subr.bf16.mxu0 0
          %556 = vmatpush1.bf16.msra.mxu0 0
          %557 = vmatprep.subr.bf16.mxu0 0
          %558 = vmatpush1.bf16.msra.mxu0 0
          %559 = vmatprep.subr.bf16.mxu0 0
          %560 = vmatpush1.bf16.msra.mxu0 0
          %561 = vmatprep.subr.bf16.mxu0 0
          %562 = vmatpush1.bf16.msra.mxu0 0
          %563 = vmatprep.subr.bf16.mxu0 0
          %564 = vmatpush1.bf16.msra.mxu0 0
          %565 = vmatprep.subr.bf16.mxu0 0
          %566 = vmatpush1.bf16.msra.mxu0 0
          %567 = vmatprep.mubr.bf16.mxu0 0
          %568 = vmatmul.mubr.bf16.gmra.mrb[0].mxu0 %v524
          %v569 = vpop.f32.mrb[0].mxu0
          %v570 = vadd.f32 %v466, %v569
          %v571 = vpop.f32.mrb[0].mxu0
          %v572 = vadd.f32 %v466, %v571
          %v573 = vpop.f32.mrb[0].mxu0
          %v574 = vadd.f32 %v471, %v573
          %v575 = vpop.f32.mrb[0].mxu0
          %v576 = vadd.f32 %v471, %v575
          %577 = vmatprep.mubr.bf16.mxu0 0
          %578 = vmatmul.mubr.bf16.gmra.mrb[0].mxu0 %v527
          %v579 = vpop.f32.mrb[0].mxu0
          %v580 = vadd.f32 %v476, %v579
          %v581 = vpop.f32.mrb[0].mxu0
          %v582 = vadd.f32 %v476, %v581
          %v583 = vpop.f32.mrb[0].mxu0
          %v584 = vadd.f32 %v481, %v583
          %v585 = vpop.f32.mrb[0].mxu0
          %v586 = vadd.f32 %v481, %v585
          %587 = vmatprep.mubr.bf16.mxu0 0
          %588 = vmatmul.mubr.bf16.gmra.mrb[0].mxu0 %v530
          %v589 = vpop.f32.mrb[0].mxu0
          %v590 = vadd.f32 %v486, %v589
          %v591 = vpop.f32.mrb[0].mxu0
          %v592 = vadd.f32 %v486, %v591
          %v593 = vpop.f32.mrb[0].mxu0
          %v594 = vadd.f32 %v491, %v593
          %v595 = vpop.f32.mrb[0].mxu0
          %v596 = vadd.f32 %v491, %v595
          %597 = vmatprep.mubr.bf16.mxu0 0
          %598 = vmatmul.mubr.bf16.gmra.mrb[0].mxu0 %v533
          %v599 = vpop.f32.mrb[0].mxu0
          %v600 = vadd.f32 %v496, %v599
          %v601 = vpop.f32.mrb[0].mxu0
          %v602 = vadd.f32 %v496, %v601
          %v603 = vpop.f32.mrb[0].mxu0
          %v604 = vadd.f32 %v501, %v603
          %v605 = vpop.f32.mrb[0].mxu0
          %v606 = vadd.f32 %v501, %v605
          %607 = vdwg.mxu0
          %608 = vst [vmem:[#allocation3] sm:$0xff] %v570
          %609 = vst [vmem:[#allocation3 + $0x8] sm:$0xff] %v572
          %610 = vst [vmem:[#allocation3 + $0x10] sm:$0xff] %v574
          %611 = vst [vmem:[#allocation3 + $0x18] sm:$0xff] %v576
          %612 = vst [vmem:[#allocation3 + $0x20] sm:$0xff] %v580
          %613 = vst [vmem:[#allocation3 + $0x28] sm:$0xff] %v582
          %614 = vst [vmem:[#allocation3 + $0x30] sm:$0xff] %v584
          %615 = vst [vmem:[#allocation3 + $0x38] sm:$0xff] %v586
          %616 = vst [vmem:[#allocation3 + $0x40] sm:$0xff] %v590
          %617 = vst [vmem:[#allocation3 + $0x48] sm:$0xff] %v592
          %618 = vst [vmem:[#allocation3 + $0x50] sm:$0xff] %v594
          %619 = vst [vmem:[#allocation3 + $0x58] sm:$0xff] %v596
          %620 = vst [vmem:[#allocation3 + $0x60] sm:$0xff] %v600
          %621 = vst [vmem:[#allocation3 + $0x68] sm:$0xff] %v602
          %622 = vst [vmem:[#allocation3 + $0x70] sm:$0xff] %v604
          %623 = vst [vmem:[#allocation3 + $0x78] sm:$0xff] %v606
        $region48: #{tpu_custom_call.1} parent=35 // pred_fallthru
          _
        %s624 = smul.u32 %s27, 128
        %s625 = sshra.s32 %s624, 7
        %s626 = sand.u32 %s624, 127
        %s627 = smul.addr %s625, 8
        %s628 = scalar_lea.vmem [#allocation3], %s627
        %v629 = vld [vmem:[%s628] sm:$0xff]
        %v630 = vld [vmem:[%s628 + $0x10] sm:$0xff]
        %v631 = vpack.c.bf16 %v630, %v629
        %v632 = vld [vmem:[#allocation3 + $0x20] sm:$0xff]
        %v633 = vld [vmem:[#allocation3 + $0x28] sm:$0xff]
        %v634 = vld [vmem:[#allocation3 + $0x30] sm:$0xff]
        %v635 = vld [vmem:[#allocation3 + $0x38] sm:$0xff]
        %v636 = vpack.c.bf16 %v634, %v632
        %v637 = vpack.c.bf16 %v635, %v633
        %v638 = vld [vmem:[#allocation3 + $0x40] sm:$0xff]
        %v639 = vld [vmem:[#allocation3 + $0x48] sm:$0xff]
        %v640 = vld [vmem:[#allocation3 + $0x50] sm:$0xff]
        %v641 = vld [vmem:[#allocation3 + $0x58] sm:$0xff]
        %v642 = vld [vmem:[#allocation3 + $0x60] sm:$0xff]
        %v643 = vld [vmem:[#allocation3 + $0x68] sm:$0xff]
        %v644 = vld [vmem:[#allocation3 + $0x70] sm:$0xff]
        %v645 = vld [vmem:[#allocation3 + $0x78] sm:$0xff]
        %v646 = vpack.c.bf16 %v640, %v638
        %v647 = vpack.c.bf16 %v641, %v639
        %v648 = vpack.c.bf16 %v644, %v642
        %v649 = vpack.c.bf16 %v645, %v643
        %650 = vxpose.xlu0.c.b16.start [1/8] %v631, 128
        %651 = vxpose.xlu0.c.b16.cont [2/8] 0, 128
        %652 = vxpose.xlu0.c.b16.cont [3/8] 0, 128
        %653 = vxpose.xlu0.c.b16.cont [4/8] 0, 128
        %654 = vxpose.xlu0.c.b16.cont [5/8] 0, 128
        %655 = vxpose.xlu0.c.b16.cont [6/8] 0, 128
        %656 = vxpose.xlu0.c.b16.cont [7/8] 0, 128
        %657 = vxpose.xlu0.c.b16.end [8/8] 0, 128
        %v658 = vpop.trf.xlu0
        %v659 = vpop.trf.xlu0
        %v660 = vpop.trf.xlu0
        %v661 = vpop.trf.xlu0
        %v662 = vpop.trf.xlu0
        %v663 = vpop.trf.xlu0
        %v664 = vpop.trf.xlu0
        %v665 = vpop.trf.xlu0
        %vm666 = vcmask 130048
        %v668 = vsel %vm666, %v658, 0
        %v671 = vsel %vm666, %v659, 0
        %v674 = vsel %vm666, %v660, 0
        %v677 = vsel %vm666, %v661, 0
        %v680 = vsel %vm666, %v662, 0
        %v683 = vsel %vm666, %v663, 0
        %v686 = vsel %vm666, %v664, 0
        %v689 = vsel %vm666, %v665, 0
        %691 = vmatprep.subr.bf16.mxu0 %v637
        %692 = vmatpush1.bf16.msra.mxu0 %v636
        %693 = vmatprep.subr.bf16.mxu0 0
        %694 = vmatpush1.bf16.msra.mxu0 0
        %695 = vmatprep.subr.bf16.mxu0 0
        %696 = vmatpush1.bf16.msra.mxu0 0
        %697 = vmatprep.subr.bf16.mxu0 0
        %698 = vmatpush1.bf16.msra.mxu0 0
        %699 = vmatprep.subr.bf16.mxu0 0
        %700 = vmatpush1.bf16.msra.mxu0 0
        %701 = vmatprep.subr.bf16.mxu0 0
        %702 = vmatpush1.bf16.msra.mxu0 0
        %703 = vmatprep.subr.bf16.mxu0 0
        %704 = vmatpush1.bf16.msra.mxu0 0
        %705 = vmatprep.subr.bf16.mxu0 0
        %706 = vmatpush1.bf16.msra.mxu0 0
        %707 = vmatprep.subr.bf16.mxu0 0
        %708 = vmatpush1.bf16.msra.mxu0 0
        %709 = vmatprep.subr.bf16.mxu0 0
        %710 = vmatpush1.bf16.msra.mxu0 0
        %711 = vmatprep.subr.bf16.mxu0 0
        %712 = vmatpush1.bf16.msra.mxu0 0
        %713 = vmatprep.subr.bf16.mxu0 0
        %714 = vmatpush1.bf16.msra.mxu0 0
        %715 = vmatprep.subr.bf16.mxu0 0
        %716 = vmatpush1.bf16.msra.mxu0 0
        %717 = vmatprep.subr.bf16.mxu0 0
        %718 = vmatpush1.bf16.msra.mxu0 0
        %719 = vmatprep.subr.bf16.mxu0 0
        %720 = vmatpush1.bf16.msra.mxu0 0
        %721 = vmatprep.subr.bf16.mxu0 0
        %722 = vmatpush1.bf16.msra.mxu0 0
        %723 = vmatprep.mubr.bf16.mxu0 0
        %724 = vmatmul.mubr.bf16.gmra.mrb[0].mxu0 %v668
        %v725 = vpop.f32.mrb[0].mxu0
        %v726 = vadd.f32 0.0, %v725
        %v727 = vpop.f32.mrb[0].mxu0
        %v728 = vadd.f32 0.0, %v727
        %v729 = vpop.f32.mrb[0].mxu0
        %v730 = vadd.f32 0.0, %v729
        %v731 = vpop.f32.mrb[0].mxu0
        %v732 = vadd.f32 0.0, %v731
        %733 = vmatprep.mubr.bf16.mxu0 0
        %734 = vmatmul.mubr.bf16.gmra.mrb[0].mxu0 %v671
        %v735 = vpop.f32.mrb[0].mxu0
        %v736 = vadd.f32 0.0, %v735
        %v737 = vpop.f32.mrb[0].mxu0
        %v738 = vadd.f32 0.0, %v737
        %v739 = vpop.f32.mrb[0].mxu0
        %v740 = vadd.f32 0.0, %v739
        %v741 = vpop.f32.mrb[0].mxu0
        %v742 = vadd.f32 0.0, %v741
        %743 = vmatprep.mubr.bf16.mxu0 0
        %744 = vmatmul.mubr.bf16.gmra.mrb[0].mxu0 %v674
        %v745 = vpop.f32.mrb[0].mxu0
        %v746 = vadd.f32 0.0, %v745
        %v747 = vpop.f32.mrb[0].mxu0
        %v748 = vadd.f32 0.0, %v747
        %v749 = vpop.f32.mrb[0].mxu0
        %v750 = vadd.f32 0.0, %v749
        %v751 = vpop.f32.mrb[0].mxu0
        %v752 = vadd.f32 0.0, %v751
        %753 = vmatprep.mubr.bf16.mxu0 0
        %754 = vmatmul.mubr.bf16.gmra.mrb[0].mxu0 %v677
        %v755 = vpop.f32.mrb[0].mxu0
        %v756 = vadd.f32 0.0, %v755
        %v757 = vpop.f32.mrb[0].mxu0
        %v758 = vadd.f32 0.0, %v757
        %v759 = vpop.f32.mrb[0].mxu0
        %v760 = vadd.f32 0.0, %v759
        %v761 = vpop.f32.mrb[0].mxu0
        %v762 = vadd.f32 0.0, %v761
        %763 = vmatprep.mubr.bf16.mxu0 0
        %764 = vmatmul.mubr.bf16.gmra.mrb[0].mxu0 %v680
        %v765 = vpop.f32.mrb[0].mxu0
        %v766 = vadd.f32 0.0, %v765
        %v767 = vpop.f32.mrb[0].mxu0
        %v768 = vadd.f32 0.0, %v767
        %v769 = vpop.f32.mrb[0].mxu0
        %v770 = vadd.f32 0.0, %v769
        %v771 = vpop.f32.mrb[0].mxu0
        %v772 = vadd.f32 0.0, %v771
        %773 = vmatprep.mubr.bf16.mxu0 0
        %774 = vmatmul.mubr.bf16.gmra.mrb[0].mxu0 %v683
        %v775 = vpop.f32.mrb[0].mxu0
        %v776 = vadd.f32 0.0, %v775
        %v777 = vpop.f32.mrb[0].mxu0
        %v778 = vadd.f32 0.0, %v777
        %v779 = vpop.f32.mrb[0].mxu0
        %v780 = vadd.f32 0.0, %v779
        %v781 = vpop.f32.mrb[0].mxu0
        %v782 = vadd.f32 0.0, %v781
        %783 = vmatprep.mubr.bf16.mxu0 0
        %784 = vmatmul.mubr.bf16.gmra.mrb[0].mxu0 %v686
        %v785 = vpop.f32.mrb[0].mxu0
        %v786 = vadd.f32 0.0, %v785
        %v787 = vpop.f32.mrb[0].mxu0
        %v788 = vadd.f32 0.0, %v787
        %v789 = vpop.f32.mrb[0].mxu0
        %v790 = vadd.f32 0.0, %v789
        %v791 = vpop.f32.mrb[0].mxu0
        %v792 = vadd.f32 0.0, %v791
        %793 = vmatprep.mubr.bf16.mxu0 0
        %794 = vmatmul.mubr.bf16.gmra.mrb[0].mxu0 %v689
        %v795 = vpop.f32.mrb[0].mxu0
        %v796 = vadd.f32 0.0, %v795
        %v797 = vpop.f32.mrb[0].mxu0
        %v798 = vadd.f32 0.0, %v797
        %v799 = vpop.f32.mrb[0].mxu0
        %v800 = vadd.f32 0.0, %v799
        %v801 = vpop.f32.mrb[0].mxu0
        %v802 = vadd.f32 0.0, %v801
        %803 = vdwg.mxu0
        %v804 = vmax.f32 %v726, %v728
        %805 = vmax.xlane.f32.xlu0 %v804
        %v806 = vpop.xlane.xlu0 %805
        %v807 = vmax.f32 %v730, %v732
        %808 = vmax.xlane.f32.xlu0 %v807
        %v809 = vpop.xlane.xlu0 %808
        %v810 = vmax.f32 %v736, %v738
        %811 = vmax.xlane.f32.xlu0 %v810
        %v812 = vpop.xlane.xlu0 %811
        %v813 = vmax.f32 %v740, %v742
        %814 = vmax.xlane.f32.xlu0 %v813
        %v815 = vpop.xlane.xlu0 %814
        %v816 = vmax.f32 %v746, %v748
        %817 = vmax.xlane.f32.xlu0 %v816
        %v818 = vpop.xlane.xlu0 %817
        %v819 = vmax.f32 %v750, %v752
        %820 = vmax.xlane.f32.xlu0 %v819
        %v821 = vpop.xlane.xlu0 %820
        %v822 = vmax.f32 %v756, %v758
        %823 = vmax.xlane.f32.xlu0 %v822
        %v824 = vpop.xlane.xlu0 %823
        %v825 = vmax.f32 %v760, %v762
        %826 = vmax.xlane.f32.xlu0 %v825
        %v827 = vpop.xlane.xlu0 %826
        %v828 = vmax.f32 %v766, %v768
        %829 = vmax.xlane.f32.xlu0 %v828
        %v830 = vpop.xlane.xlu0 %829
        %v831 = vmax.f32 %v770, %v772
        %832 = vmax.xlane.f32.xlu0 %v831
        %v833 = vpop.xlane.xlu0 %832
        %v834 = vmax.f32 %v776, %v778
        %835 = vmax.xlane.f32.xlu0 %v834
        %v836 = vpop.xlane.xlu0 %835
        %v837 = vmax.f32 %v780, %v782
        %838 = vmax.xlane.f32.xlu0 %v837
        %v839 = vpop.xlane.xlu0 %838
        %v840 = vmax.f32 %v786, %v788
        %841 = vmax.xlane.f32.xlu0 %v840
        %v842 = vpop.xlane.xlu0 %841
        %v843 = vmax.f32 %v790, %v792
        %844 = vmax.xlane.f32.xlu0 %v843
        %v845 = vpop.xlane.xlu0 %844
        %v846 = vmax.f32 %v796, %v798
        %847 = vmax.xlane.f32.xlu0 %v846
        %v848 = vpop.xlane.xlu0 %847
        %v849 = vmax.f32 %v800, %v802
        %850 = vmax.xlane.f32.xlu0 %v849
        %v851 = vpop.xlane.xlu0 %850
        %v852 = vsub.f32 %v726, %v806
        %v853 = vsub.f32 %v728, %v806
        %v854 = vsub.f32 %v730, %v809
        %v855 = vsub.f32 %v732, %v809
        %v856 = vsub.f32 %v736, %v812
        %v857 = vsub.f32 %v738, %v812
        %v858 = vsub.f32 %v740, %v815
        %v859 = vsub.f32 %v742, %v815
        %v860 = vsub.f32 %v746, %v818
        %v861 = vsub.f32 %v748, %v818
        %v862 = vsub.f32 %v750, %v821
        %v863 = vsub.f32 %v752, %v821
        %v864 = vsub.f32 %v756, %v824
        %v865 = vsub.f32 %v758, %v824
        %v866 = vsub.f32 %v760, %v827
        %v867 = vsub.f32 %v762, %v827
        %v868 = vsub.f32 %v766, %v830
        %v869 = vsub.f32 %v768, %v830
        %v870 = vsub.f32 %v770, %v833
        %v871 = vsub.f32 %v772, %v833
        %v872 = vsub.f32 %v776, %v836
        %v873 = vsub.f32 %v778, %v836
        %v874 = vsub.f32 %v780, %v839
        %v875 = vsub.f32 %v782, %v839
        %v876 = vsub.f32 %v786, %v842
        %v877 = vsub.f32 %v788, %v842
        %v878 = vsub.f32 %v790, %v845
        %v879 = vsub.f32 %v792, %v845
        %v880 = vsub.f32 %v796, %v848
        %v881 = vsub.f32 %v798, %v848
        %v882 = vsub.f32 %v800, %v851
        %v883 = vsub.f32 %v802, %v851
        %v884 = vmul.f32 %v852, 1.442695
        %v885 = vpow.pop %v884
        %v886 = vmul.f32 %v853, 1.442695
        %v887 = vpow.pop %v886
        %v888 = vmul.f32 %v854, 1.442695
        %v889 = vpow.pop %v888
        %v890 = vmul.f32 %v855, 1.442695
        %v891 = vpow.pop %v890
        %v892 = vmul.f32 %v856, 1.442695
        %v893 = vpow.pop %v892
        %v894 = vmul.f32 %v857, 1.442695
        %v895 = vpow.pop %v894
        %v896 = vmul.f32 %v858, 1.442695
        %v897 = vpow.pop %v896
        %v898 = vmul.f32 %v859, 1.442695
        %v899 = vpow.pop %v898
        %v900 = vmul.f32 %v860, 1.442695
        %v901 = vpow.pop %v900
        %v902 = vmul.f32 %v861, 1.442695
        %v903 = vpow.pop %v902
        %v904 = vmul.f32 %v862, 1.442695
        %v905 = vpow.pop %v904
        %v906 = vmul.f32 %v863, 1.442695
        %v907 = vpow.pop %v906
        %v908 = vmul.f32 %v864, 1.442695
        %v909 = vpow.pop %v908
        %v910 = vmul.f32 %v865, 1.442695
        %v911 = vpow.pop %v910
        %v912 = vmul.f32 %v866, 1.442695
        %v913 = vpow.pop %v912
        %v914 = vmul.f32 %v867, 1.442695
        %v915 = vpow.pop %v914
        %v916 = vmul.f32 %v868, 1.442695
        %v917 = vpow.pop %v916
        %v918 = vmul.f32 %v869, 1.442695
        %v919 = vpow.pop %v918
        %v920 = vmul.f32 %v870, 1.442695
        %v921 = vpow.pop %v920
        %v922 = vmul.f32 %v871, 1.442695
        %v923 = vpow.pop %v922
        %v924 = vmul.f32 %v872, 1.442695
        %v925 = vpow.pop %v924
        %v926 = vmul.f32 %v873, 1.442695
        %v927 = vpow.pop %v926
        %v928 = vmul.f32 %v874, 1.442695
        %v929 = vpow.pop %v928
        %v930 = vmul.f32 %v875, 1.442695
        %v931 = vpow.pop %v930
        %v932 = vmul.f32 %v876, 1.442695
        %v933 = vpow.pop %v932
        %v934 = vmul.f32 %v877, 1.442695
        %v935 = vpow.pop %v934
        %v936 = vmul.f32 %v878, 1.442695
        %v937 = vpow.pop %v936
        %v938 = vmul.f32 %v879, 1.442695
        %v939 = vpow.pop %v938
        %v940 = vmul.f32 %v880, 1.442695
        %v941 = vpow.pop %v940
        %v942 = vmul.f32 %v881, 1.442695
        %v943 = vpow.pop %v942
        %v944 = vmul.f32 %v882, 1.442695
        %v945 = vpow.pop %v944
        %v946 = vmul.f32 %v883, 1.442695
        %v947 = vpow.pop %v946
        %v948 = vadd.f32 %v885, %v887
        %949 = vadd.xlane.f32.xlu0 %v948
        %v950 = vpop.xlane.xlu0 %949
        %v951 = vadd.f32 %v889, %v891
        %952 = vadd.xlane.f32.xlu0 %v951
        %v953 = vpop.xlane.xlu0 %952
        %v954 = vadd.f32 %v893, %v895
        %955 = vadd.xlane.f32.xlu0 %v954
        %v956 = vpop.xlane.xlu0 %955
        %v957 = vadd.f32 %v897, %v899
        %958 = vadd.xlane.f32.xlu0 %v957
        %v959 = vpop.xlane.xlu0 %958
        %v960 = vadd.f32 %v901, %v903
        %961 = vadd.xlane.f32.xlu0 %v960
        %v962 = vpop.xlane.xlu0 %961
        %v963 = vadd.f32 %v905, %v907
        %964 = vadd.xlane.f32.xlu0 %v963
        %v965 = vpop.xlane.xlu0 %964
        %v966 = vadd.f32 %v909, %v911
        %967 = vadd.xlane.f32.xlu0 %v966
        %v968 = vpop.xlane.xlu0 %967
        %v969 = vadd.f32 %v913, %v915
        %970 = vadd.xlane.f32.xlu0 %v969
        %v971 = vpop.xlane.xlu0 %970
        %v972 = vadd.f32 %v917, %v919
        %973 = vadd.xlane.f32.xlu0 %v972
        %v974 = vpop.xlane.xlu0 %973
        %v975 = vadd.f32 %v921, %v923
        %976 = vadd.xlane.f32.xlu0 %v975
        %v977 = vpop.xlane.xlu0 %976
        %v978 = vadd.f32 %v925, %v927
        %979 = vadd.xlane.f32.xlu0 %v978
        %v980 = vpop.xlane.xlu0 %979
        %v981 = vadd.f32 %v929, %v931
        %982 = vadd.xlane.f32.xlu0 %v981
        %v983 = vpop.xlane.xlu0 %982
        %v984 = vadd.f32 %v933, %v935
        %985 = vadd.xlane.f32.xlu0 %v984
        %v986 = vpop.xlane.xlu0 %985
        %v987 = vadd.f32 %v937, %v939
        %988 = vadd.xlane.f32.xlu0 %v987
        %v989 = vpop.xlane.xlu0 %988
        %v990 = vadd.f32 %v941, %v943
        %991 = vadd.xlane.f32.xlu0 %v990
        %v992 = vpop.xlane.xlu0 %991
        %v993 = vadd.f32 %v945, %v947
        %994 = vadd.xlane.f32.xlu0 %v993
        %v995 = vpop.xlane.xlu0 %994
        %v996 = vrcp.pop %v950
        %v997 = vrcp.pop %v953
        %v998 = vrcp.pop %v956
        %v999 = vrcp.pop %v959
        %v1000 = vrcp.pop %v962
        %v1001 = vrcp.pop %v965
        %v1002 = vrcp.pop %v968
        %v1003 = vrcp.pop %v971
        %v1004 = vrcp.pop %v974
        %v1005 = vrcp.pop %v977
        %v1006 = vrcp.pop %v980
        %v1007 = vrcp.pop %v983
        %v1008 = vrcp.pop %v986
        %v1009 = vrcp.pop %v989
        %v1010 = vrcp.pop %v992
        %v1011 = vrcp.pop %v995
        %v1012 = vmul.f32 %v885, %v996
        %v1013 = vmul.f32 %v887, %v996
        %v1014 = vmul.f32 %v889, %v997
        %v1015 = vmul.f32 %v891, %v997
        %v1016 = vmul.f32 %v893, %v998
        %v1017 = vmul.f32 %v895, %v998
        %v1018 = vmul.f32 %v897, %v999
        %v1019 = vmul.f32 %v899, %v999
        %v1020 = vmul.f32 %v901, %v1000
        %v1021 = vmul.f32 %v903, %v1000
        %v1022 = vmul.f32 %v905, %v1001
        %v1023 = vmul.f32 %v907, %v1001
        %v1024 = vmul.f32 %v909, %v1002
        %v1025 = vmul.f32 %v911, %v1002
        %v1026 = vmul.f32 %v913, %v1003
        %v1027 = vmul.f32 %v915, %v1003
        %v1028 = vmul.f32 %v917, %v1004
        %v1029 = vmul.f32 %v919, %v1004
        %v1030 = vmul.f32 %v921, %v1005
        %v1031 = vmul.f32 %v923, %v1005
        %v1032 = vmul.f32 %v925, %v1006
        %v1033 = vmul.f32 %v927, %v1006
        %v1034 = vmul.f32 %v929, %v1007
        %v1035 = vmul.f32 %v931, %v1007
        %v1036 = vmul.f32 %v933, %v1008
        %v1037 = vmul.f32 %v935, %v1008
        %v1038 = vmul.f32 %v937, %v1009
        %v1039 = vmul.f32 %v939, %v1009
        %v1040 = vmul.f32 %v941, %v1010
        %v1041 = vmul.f32 %v943, %v1010
        %v1042 = vmul.f32 %v945, %v1011
        %v1043 = vmul.f32 %v947, %v1011
        %v1044 = vpack.c.bf16 %v1014, %v1012
        %v1045 = vpack.c.bf16 %v1015, %v1013
        %v1046 = vpack.c.bf16 %v1018, %v1016
        %v1047 = vpack.c.bf16 %v1019, %v1017
        %v1048 = vpack.c.bf16 %v1022, %v1020
        %v1049 = vpack.c.bf16 %v1023, %v1021
        %v1050 = vpack.c.bf16 %v1026, %v1024
        %v1051 = vpack.c.bf16 %v1027, %v1025
        %v1052 = vpack.c.bf16 %v1030, %v1028
        %v1053 = vpack.c.bf16 %v1031, %v1029
        %v1054 = vpack.c.bf16 %v1034, %v1032
        %v1055 = vpack.c.bf16 %v1035, %v1033
        %v1056 = vpack.c.bf16 %v1038, %v1036
        %v1057 = vpack.c.bf16 %v1039, %v1037
        %v1058 = vpack.c.bf16 %v1042, %v1040
        %v1059 = vpack.c.bf16 %v1043, %v1041
        %1060 = vmatprep.subr.bf16.mxu0 %v1045
        %1061 = vmatpush1.bf16.xpose.msra.mxu0 %v1044
        %1062 = vmatprep.subr.bf16.mxu0 %v1047
        %1063 = vmatpush1.bf16.xpose.msra.mxu0 %v1046
        %1064 = vmatprep.subr.bf16.mxu0 %v1049
        %1065 = vmatpush1.bf16.xpose.msra.mxu0 %v1048
        %1066 = vmatprep.subr.bf16.mxu0 %v1051
        %1067 = vmatpush1.bf16.xpose.msra.mxu0 %v1050
        %1068 = vmatprep.subr.bf16.mxu0 %v1053
        %1069 = vmatpush1.bf16.xpose.msra.mxu0 %v1052
        %1070 = vmatprep.subr.bf16.mxu0 %v1055
        %1071 = vmatpush1.bf16.xpose.msra.mxu0 %v1054
        %1072 = vmatprep.subr.bf16.mxu0 %v1057
        %1073 = vmatpush1.bf16.xpose.msra.mxu0 %v1056
        %1074 = vmatprep.subr.bf16.mxu0 %v1059
        %1075 = vmatpush1.bf16.xpose.msra.mxu0 %v1058
        %1076 = vmatprep.subr.bf16.mxu0 0
        %1077 = vmatpush1.bf16.xpose.msra.mxu0 0
        %1078 = vmatprep.subr.bf16.mxu0 0
        %1079 = vmatpush1.bf16.xpose.msra.mxu0 0
        %1080 = vmatprep.subr.bf16.mxu0 0
        %1081 = vmatpush1.bf16.xpose.msra.mxu0 0
        %1082 = vmatprep.subr.bf16.mxu0 0
        %1083 = vmatpush1.bf16.xpose.msra.mxu0 0
        %1084 = vmatprep.subr.bf16.mxu0 0
        %1085 = vmatpush1.bf16.xpose.msra.mxu0 0
        %1086 = vmatprep.subr.bf16.mxu0 0
        %1087 = vmatpush1.bf16.xpose.msra.mxu0 0
        %1088 = vmatprep.subr.bf16.mxu0 0
        %1089 = vmatpush1.bf16.xpose.msra.mxu0 0
        %1090 = vmatprep.subr.bf16.mxu0 0
        %1091 = vmatpush1.bf16.xpose.msra.mxu0 0
        %1092 = vmatprep.mubr.bf16.mxu0 %v647
        %1093 = vmatmul.mubr.bf16.gmra.mrb[0].mxu0 %v646
        %v1094 = vpop.f32.mrb[0].mxu0
        %v1095 = vadd.f32 0.0, %v1094
        %v1096 = vpop.f32.mrb[0].mxu0
        %v1097 = vpop.f32.mrb[0].mxu0
        %v1098 = vadd.f32 0.0, %v1097
        %v1099 = vpop.f32.mrb[0].mxu0
        %1100 = vmatprep.mubr.bf16.mxu0 %v649
        %1101 = vmatmul.mubr.bf16.gmra.mrb[0].mxu0 %v648
        %v1102 = vpop.f32.mrb[0].mxu0
        %v1103 = vadd.f32 0.0, %v1102
        %v1104 = vpop.f32.mrb[0].mxu0
        %v1105 = vpop.f32.mrb[0].mxu0
        %v1106 = vadd.f32 0.0, %v1105
        %v1107 = vpop.f32.mrb[0].mxu0
        %1108 = vdwg.mxu0
        %v1109 = vstv %s246
        %v1110 = vmul.f32 %v1109, %v1095
        %v1111 = vmul.f32 %v1109, %v1098
        %v1112 = vmul.f32 %v1109, %v1103
        %v1113 = vmul.f32 %v1109, %v1106
        %s1114 = smul.addr %s625, 8
        %s1115 = scalar_lea.vmem [#allocation2], %s1114
        %v1116 = vld [vmem:[%s1115] sm:$0xff]
        %v1117 = vld [vmem:[%s1115 + $0x10] sm:$0xff]
        %v1118 = vld [vmem:[%s1115 + $0x20] sm:$0xff]
        %v1119 = vld [vmem:[%s1115 + $0x30] sm:$0xff]
        %v1120 = vadd.f32 %v1110, %v1116
        %v1121 = vadd.f32 %v1111, %v1117
        %v1122 = vadd.f32 %v1112, %v1118
        %v1123 = vadd.f32 %v1113, %v1119
        %1124 = vst [vmem:[%s243] sm:$0xff] %v1120
        %1125 = vst [vmem:[%s243 + $0x8] sm:$0xff] %v1121
        %1126 = vst [vmem:[%s243 + $0x10] sm:$0xff] %v1122
        %1127 = vst [vmem:[%s243 + $0x18] sm:$0xff] %v1123
        %s1128 = sand.u32 %s133, 1
        %s1129 = scalar_lea.sflag [#allocation6], %s1128
        %s1130 = sand.u32 %s133, 1
        %s1131 = smul.addr %s1130, 32
        %s1132 = scalar_lea.vmem [#allocation9], %s1131
        // Predicated region
        $region49: #{tpu_custom_call.1} parent=35 // pred_check
          %p1133 = pneg %p143
        $region50: #{tpu_custom_call.1} parent=35 // pred_check_branch
          %1135 = sbr.rel (%p1133) target = $region52
        $region51: #{tpu_custom_call.1} parent=35 // pred_region
          %s1137 = ssub.s32 512, 512
          %1138 = vsyncadd %s1129, %s1137
          %s1139 = smul.addr %s26, 8
          %s1140 = sadd.s32 %s27, %s1139
          %s1141 = smul.addr %s1140, 128
          %s1142 = scalar_lea.hbm %s4, %s1141
          %s1143 = sshll.u32 %s1132, 4
          %s1144 = int_to_ptr.vmem [resolvable:$true] %s1143
          %1149 = dma.vmem_to_hbm [thread:$0]  %s1144, 512, %s1142, %s1129, 128, 256, 8
        $region52: #{tpu_custom_call.1} parent=35 // pred_fallthru
          _
      $region36: #{tpu_custom_call.1} parent=5 // pred_fallthru
        _
      %p1150 = scmp.le.s32.totalorder 2, %s17
      // Predicated region
      $region53: #{tpu_custom_call.1} parent=5 // pred_check
        %p1151 = pneg %p1150
      $region54: #{tpu_custom_call.1} parent=5 // pred_check_branch
        %1153 = sbr.rel (%p1151) target = $region56
      $region55: #{tpu_custom_call.1} parent=5 // pred_region
        %s1154 = ssub.s32 %s17, 2
        // Predicated region
        $region57: #{tpu_custom_call.1} parent=55 // pred_check
          %p1155 = pneg %p149
        $region58: #{tpu_custom_call.1} parent=55 // pred_check_branch
          %1157 = sbr.rel (%p1155) target = $region60
        $region59: #{tpu_custom_call.1} parent=55 // pred_region
          %s1158 = sand.u32 %s134, 1
          %s1159 = scalar_lea.sflag [#allocation6], %s1158
          %s1160 = sand.u32 %s134, 1
          %s1161 = smul.addr %s1160, 32
          %s1162 = scalar_lea.vmem [#allocation9], %s1161
          %1163 = dma.done %s1159, 512
        $region60: #{tpu_custom_call.1} parent=55 // pred_fallthru
          _
      $region56: #{tpu_custom_call.1} parent=5 // pred_fallthru
        _
    $region6: #{tpu_custom_call.1} parent=1 // loop_footer
      %s21 = sadd.s32 1, %s17
    $region7: #{tpu_custom_call.1} parent=1 // loop_footer_branch
      %16 = sbr.rel target = $region3
    $region8: #{tpu_custom_call.1} parent=1 // loop_exit
      _
    %1164 = vsyncpa [#allocation5], 1
    %s1165 = scalar_lea.sflag [#allocation5], 1
    %1166 = vsyncpa %s1165, 1
    %1167 = vsyncpa [#allocation6], 1
    %s1168 = scalar_lea.sflag [#allocation6], 1
    %1169 = vsyncpa %s1168, 1
    %1170 = vsyncpa [#allocation7], 1
    %s1171 = scalar_lea.sflag [#allocation7], 1
    %1172 = vsyncpa %s1171, 1

</llo_original>
